<compile_context>
chip_gen: v6e
topology: v6e:2x2x1
jax: 0.10.0
libtpu: 0.0.40
codegen_flags: <defaults>
</compile_context>

<pallas_src>
import math
import functools

import jax
import jax.numpy as jnp
from jax import lax
from jax.experimental import pallas as pl
from jax.experimental.pallas import tpu as pltpu


# ----------------------------------------------------------------------------
# Tile helper: largest divisor of `dim` <= target that is a multiple of `align`;
# falls back to the full dim (a full-extent block is always a legal BlockSpec).
# ----------------------------------------------------------------------------
def _pick_tile(dim, target, align):
    if dim <= target:
        return dim
    start = target - (target % align)
    for t in range(start, 0, -align):
        if dim % t == 0:
            return t
    return dim


# ----------------------------------------------------------------------------
# Tiled linear kernel:  y = x @ W^T + b
#   x: (M, K), W: (N, K) [PyTorch layout, stored bf16], b: (1, N) f32.
#   grid = (M/tm, N/tn, K/tk); K is the reduction axis (last, "arbitrary").
#   MXU operands are bf16, accumulation is an f32 VMEM scratch tile.
# ----------------------------------------------------------------------------
def _linear_kernel(x_ref, w_ref, b_ref, o_ref, acc_ref):
    k = pl.program_id(2)

    @pl.when(k == 0)
    def _():
        acc_ref[...] = jnp.zeros_like(acc_ref)

    # Contract last dims of x (tm, tk) and w (tn, tk): no in-kernel transpose.
    acc_ref[...] += lax.dot_general(
        x_ref[...].astype(jnp.bfloat16),
        w_ref[...].astype(jnp.bfloat16),
        dimension_numbers=(((1,), (1,)), ((), ())),
        preferred_element_type=jnp.float32,
    )

    @pl.when(k == pl.num_programs(2) - 1)
    def _():
        o_ref[...] = (acc_ref[...] + b_ref[...]).astype(o_ref.dtype)


def linear(x, w, b, out_dtype=None, *, tm_target=512, tn_target=1024, tk_target=1024):
    """x: (M, K), w: (N, K), b: (N,) -> (M, N) in out_dtype (default x.dtype)."""
    M, K = x.shape
    N, K2 = w.shape
    assert K == K2
    if out_dtype is None:
        out_dtype = x.dtype
    tm = _pick_tile(M, tm_target, 128)
    tn = _pick_tile(N, tn_target, 128)
    tk = _pick_tile(K, tk_target, 128)
    b2 = b.reshape(1, N)
    return pl.pallas_call(
        _linear_kernel,
        out_shape=jax.ShapeDtypeStruct((M, N), out_dtype),
        grid=(M // tm, N // tn, K // tk),
        in_specs=[
            pl.BlockSpec((tm, tk), lambda i, j, k: (i, k)),
            pl.BlockSpec((tn, tk), lambda i, j, k: (j, k)),
            pl.BlockSpec((1, tn), lambda i, j, k: (0, j)),
        ],
        out_specs=pl.BlockSpec((tm, tn), lambda i, j, k: (i, j)),
        scratch_shapes=[pltpu.VMEM((tm, tn), jnp.float32)],
        compiler_params=pltpu.CompilerParams(
            dimension_semantics=("parallel", "parallel", "arbitrary")
        ),
    )(x, w, b2)


# ----------------------------------------------------------------------------
# Flash-attention kernel body (shared by the head-folded and head-split paths).
# Refs: q (tq, d_k), k/v (tkv, d_k), ctx (tq, d_k), lse (tq, 1).
# The kv grid axis (index `kv_axis`) is the online-softmax reduction axis.
# ----------------------------------------------------------------------------
def _flash_kernel(q_ref, k_ref, v_ref, ctx_ref, lse_ref,
                  m_sc, l_sc, acc_sc, *, kv_axis):
    ki = pl.program_id(kv_axis)

    @pl.when(ki == 0)
    def _():
        m_sc[...] = jnp.full_like(m_sc, -jnp.inf)
        l_sc[...] = jnp.zeros_like(l_sc)
        acc_sc[...] = jnp.zeros_like(acc_sc)

    q = q_ref[...].astype(jnp.bfloat16)          # bf16 MXU operands
    k = k_ref[...].astype(jnp.bfloat16)

    # 1/sqrt(d_k) is folded into w_q / b_q (prepare_params): no per-score scale.
    s = lax.dot_general(
        q, k, dimension_numbers=(((1,), (1,)), ((), ())),
        preferred_element_type=jnp.float32,
    )                                            # (tq, tkv) f32

    m_prev = m_sc[...]
    m_new = jnp.maximum(m_prev, jnp.max(s, axis=-1, keepdims=True))
    alpha = jnp.exp(m_prev - m_new)
    p = jnp.exp(s - m_new)                       # f32 exp (v5e-safe)
    l_sc[...] = alpha * l_sc[...] + jnp.sum(p, axis=-1, keepdims=True)
    acc_sc[...] = alpha * acc_sc[...] + jnp.dot(
        p.astype(v_ref.dtype), v_ref[...], preferred_element_type=jnp.float32)
    m_sc[...] = m_new

    @pl.when(ki == pl.num_programs(kv_axis) - 1)
    def _():
        inv_l = pl.reciprocal(l_sc[...], approx=True)        # EUP slot
        ctx_ref[...] = (acc_sc[...] * inv_l).astype(ctx_ref.dtype)
        lse_ref[...] = (m_sc[...] + jnp.log(l_sc[...])).astype(lse_ref.dtype)


def _flash_attention_folded(q, k, v, *, num_heads, d_k, q_off=0, k_off=0, v_off=0,
                            tq_target=256, tkv_target=512):
    """Head-folded path (d_k % 128 == 0).
    q: (B, Sq, *), k/v: (B, Skv, *) where heads live as contiguous d_k blocks
    along the last dim starting at block offsets q_off/k_off/v_off (so the packed
    (B, S, 3D) QKV tensor can be passed directly for all three inputs).
    Returns ctx (B, Sq, H*d_k) bf16 in merged-head layout and lse (B, H, Sq, 1)."""
    B, Sq = q.shape[0], q.shape[1]
    Skv = k.shape[1]
    H = num_heads
    D = H * d_k
    tq = _pick_tile(Sq, tq_target, 128)
    tkv = _pick_tile(Skv, tkv_target, 128)
    kernel = functools.partial(_flash_kernel, kv_axis=3)
    ctx, lse = pl.pallas_call(
        kernel,
        out_shape=(
            jax.ShapeDtypeStruct((B, Sq, D), jnp.bfloat16),
            jax.ShapeDtypeStruct((B, H, Sq, 1), jnp.float32),
        ),
        grid=(B, H, Sq // tq, Skv // tkv),
        in_specs=[
            pl.BlockSpec((None, tq, d_k), lambda b, h, qi, ki: (b, qi, q_off + h)),
            pl.BlockSpec((None, tkv, d_k), lambda b, h, qi, ki: (b, ki, k_off + h)),
            pl.BlockSpec((None, tkv, d_k), lambda b, h, qi, ki: (b, ki, v_off + h)),
        ],
        out_specs=(
            pl.BlockSpec((None, tq, d_k), lambda b, h, qi, ki: (b, qi, h)),
            pl.BlockSpec((None, None, tq, 1), lambda b, h, qi, ki: (b, h, qi, 0)),
        ),
        scratch_shapes=[
            pltpu.VMEM((tq, 1), jnp.float32),     # running max
            pltpu.VMEM((tq, 1), jnp.float32),     # running denominator
            pltpu.VMEM((tq, d_k), jnp.float32),   # context accumulator
        ],
        compiler_params=pltpu.CompilerParams(
            dimension_semantics=("parallel", "parallel", "parallel", "arbitrary")
        ),
    )(q, k, v)
    return ctx, lse


def _flash_attention_heads(q, k, v, *, tq_target=256, tkv_target=512):
    """Fallback path (d_k < 128): q/k/v pre-split as (B*H, S, d_k)."""
    BH, Sq, d_k = q.shape
    Skv = k.shape[1]
    tq = _pick_tile(Sq, tq_target, 128)
    tkv = _pick_tile(Skv, tkv_target, 128)
    kernel = functools.partial(_flash_kernel, kv_axis=2)
    ctx, lse = pl.pallas_call(
        kernel,
        out_shape=(
            jax.ShapeDtypeStruct((BH, Sq, d_k), jnp.bfloat16),
            jax.ShapeDtypeStruct((BH, Sq, 1), jnp.float32),
        ),
        grid=(BH, Sq // tq, Skv // tkv),
        in_specs=[
            pl.BlockSpec((None, tq, d_k), lambda b, qi, ki: (b, qi, 0)),
            pl.BlockSpec((None, tkv, d_k), lambda b, qi, ki: (b, ki, 0)),
            pl.BlockSpec((None, tkv, d_k), lambda b, qi, ki: (b, ki, 0)),
        ],
        out_specs=(
            pl.BlockSpec((None, tq, d_k), lambda b, qi, ki: (b, qi, 0)),
            pl.BlockSpec((None, tq, 1), lambda b, qi, ki: (b, qi, 0)),
        ),
        scratch_shapes=[
            pltpu.VMEM((tq, 1), jnp.float32),
            pltpu.VMEM((tq, 1), jnp.float32),
            pltpu.VMEM((tq, d_k), jnp.float32),
        ],
        compiler_params=pltpu.CompilerParams(
            dimension_semantics=("parallel", "parallel", "arbitrary")
        ),
    )(q, k, v)
    return ctx, lse


# ----------------------------------------------------------------------------
# Optional attention-weights kernel (only run when the caller wants them).
# Recomputes score tiles and normalizes with the LSE from the flash pass.
# ----------------------------------------------------------------------------
def _attn_weights_kernel(q_ref, k_ref, lse_ref, attn_ref):
    s = lax.dot_general(
        q_ref[...].astype(jnp.bfloat16), k_ref[...].astype(jnp.bfloat16),
        dimension_numbers=(((1,), (1,)), ((), ())),
        preferred_element_type=jnp.float32,
    )
    attn_ref[...] = jnp.exp(s - lse_ref[...]).astype(attn_ref.dtype)


def _attention_weights_folded(q, k, lse, *, num_heads, d_k, q_off=0, k_off=0,
                              tq_target=256, tkv_target=512):
    B, Sq = q.shape[0], q.shape[1]
    Skv = k.shape[1]
    H = num_heads
    tq = _pick_tile(Sq, tq_target, 128)
    tkv = _pick_tile(Skv, tkv_target, 128)
    return pl.pallas_call(
        _attn_weights_kernel,
        out_shape=jax.ShapeDtypeStruct((B, H, Sq, Skv), jnp.float32),
        grid=(B, H, Sq // tq, Skv // tkv),
        in_specs=[
            pl.BlockSpec((None, tq, d_k), lambda b, h, qi, ki: (b, qi, q_off + h)),
            pl.BlockSpec((None, tkv, d_k), lambda b, h, qi, ki: (b, ki, k_off + h)),
            pl.BlockSpec((None, None, tq, 1), lambda b, h, qi, ki: (b, h, qi, 0)),
        ],
        out_specs=pl.BlockSpec((None, None, tq, tkv),
                               lambda b, h, qi, ki: (b, h, qi, ki)),
        compiler_params=pltpu.CompilerParams(
            dimension_semantics=("parallel", "parallel", "parallel", "parallel")
        ),
    )(q, k, lse)


def _attention_weights_heads(q, k, lse, *, tq_target=256, tkv_target=512):
    BH, Sq, d_k = q.shape
    Skv = k.shape[1]
    tq = _pick_tile(Sq, tq_target, 128)
    tkv = _pick_tile(Skv, tkv_target, 128)
    return pl.pallas_call(
        _attn_weights_kernel,
        out_shape=jax.ShapeDtypeStruct((BH, Sq, Skv), jnp.float32),
        grid=(BH, Sq // tq, Skv // tkv),
        in_specs=[
            pl.BlockSpec((None, tq, d_k), lambda b, qi, ki: (b, qi, 0)),
            pl.BlockSpec((None, tkv, d_k), lambda b, qi, ki: (b, ki, 0)),
            pl.BlockSpec((None, tq, 1), lambda b, qi, ki: (b, qi, 0)),
        ],
        out_specs=pl.BlockSpec((None, tq, tkv), lambda b, qi, ki: (b, qi, ki)),
        compiler_params=pltpu.CompilerParams(
            dimension_semantics=("parallel", "parallel", "parallel")
        ),
    )(q, k, lse)


# ----------------------------------------------------------------------------
# One-time parameter preparation (do this OUTSIDE the per-step forward):
#   * fold the 1/sqrt(d_k) attention scale into w_q / b_q,
#   * cast weight matrices to bf16 (MXU-native, halves weight HBM reads),
#   * pre-concatenate the fused QKV projection weights.
# ----------------------------------------------------------------------------
def prepare_params(raw, num_heads):
    d_model = raw["w_q"].shape[0]
    d_k = d_model // num_heads
    scale = 1.0 / math.sqrt(d_k)
    p = {
        "w_q": (raw["w_q"] * scale).astype(jnp.bfloat16),
        "b_q": (raw["b_q"] * scale).astype(jnp.float32),
        "w_k": raw["w_k"].astype(jnp.bfloat16),
        "b_k": raw["b_k"].astype(jnp.float32),
        "w_v": raw["w_v"].astype(jnp.bfloat16),
        "b_v": raw["b_v"].astype(jnp.float32),
        "w_o": raw["w_o"].astype(jnp.bfloat16),
        "b_o": raw["b_o"].astype(jnp.float32),
    }
    p["w_qkv"] = jnp.concatenate([p["w_q"], p["w_k"], p["w_v"]], axis=0)  # (3D, D)
    p["b_qkv"] = jnp.concatenate([p["b_q"], p["b_k"], p["b_v"]], axis=0)  # (3D,)
    return p


# ----------------------------------------------------------------------------
# Full module forward (eval mode, mask=None).
# ----------------------------------------------------------------------------
def multi_head_attention(query, key, value, params, num_heads,
                         return_attention_weights=True):
    """Returns (output (B,Sq,D) in query.dtype, attention_weights (B,H,Sq,Skv) f32
    or None).  `params` must come from prepare_params().  Pass
    return_attention_weights=False when the XAI weights are not needed — the flash
    path never materializes (Sq, Skv), so that roughly halves attention cost."""
    B, Sq, D = query.shape
    Skv = key.shape[1]
    H = num_heads
    d_k = D // H

    self_attn = (query is key) and (key is value)

    if self_attn:
        # Fused QKV projection: x read from HBM once; last-dim layout is
        # [Q heads | K heads | V heads], each head a contiguous d_k block.
        qkv = linear(query.reshape(B * Sq, D), params["w_qkv"], params["b_qkv"],
                     out_dtype=jnp.bfloat16).reshape(B, Sq, 3 * D)
    else:
        Qp = linear(query.reshape(B * Sq, D), params["w_q"], params["b_q"],
                    out_dtype=jnp.bfloat16).reshape(B, Sq, D)
        Kp = linear(key.reshape(B * Skv, D), params["w_k"], params["b_k"],
                    out_dtype=jnp.bfloat16).reshape(B, Skv, D)
        Vp = linear(value.reshape(B * Skv, D), params["w_v"], params["b_v"],
                    out_dtype=jnp.bfloat16).reshape(B, Skv, D)

    folded = (d_k % 128 == 0)

    if folded:
        # Head split/merge folded into BlockSpec index_maps: no Q/K/V slicing,
        # no JAX transposes, ctx written directly in merged (B, Sq, D) layout.
        if self_attn:
            ctx, lse = _flash_attention_folded(
                qkv, qkv, qkv, num_heads=H, d_k=d_k, q_off=0, k_off=H, v_off=2 * H)
        else:
            ctx, lse = _flash_attention_folded(Qp, Kp, Vp, num_heads=H, d_k=d_k)
    else:
        # TODO(synk): for d_k < 128 the per-head lane width is unaligned, so the
        # head split/merge stays as JAX-level transposes (extra HBM round trips).
        if self_attn:
            Qp = qkv[:, :, :D]
            Kp = qkv[:, :, D:2 * D]
            Vp = qkv[:, :, 2 * D:]

        def split_heads(x, s):
            return (x.reshape(B, s, H, d_k).transpose(0, 2, 1, 3)
                     .reshape(B * H, s, d_k))

        Qh, Kh, Vh = split_heads(Qp, Sq), split_heads(Kp, Skv), split_heads(Vp, Skv)
        ctx_h, lse = _flash_attention_heads(Qh, Kh, Vh)
        ctx = (ctx_h.reshape(B, H, Sq, d_k).transpose(0, 2, 1, 3).reshape(B, Sq, D))

    output = linear(ctx.reshape(B * Sq, D), params["w_o"], params["b_o"],
                    out_dtype=query.dtype).reshape(B, Sq, D)

    attn = None
    if return_attention_weights:
        if folded:
            if self_attn:
                attn = _attention_weights_folded(qkv, qkv, lse, num_heads=H,
                                                 d_k=d_k, q_off=0, k_off=H)
            else:
                attn = _attention_weights_folded(Qp, Kp, lse, num_heads=H, d_k=d_k)
        else:
            attn = _attention_weights_heads(Qh, Kh, lse).reshape(B, H, Sq, Skv)
    return output, attn


# ----------------------------------------------------------------------------
# Deterministic parameter init (mimics nn.Linear default U(-1/sqrt(in), 1/sqrt(in)))
# ----------------------------------------------------------------------------
def init_params(key, d_model):
    bound = 1.0 / math.sqrt(d_model)
    params = {}
    names = ["q", "k", "v", "o"]
    keys = jax.random.split(key, 2 * len(names))
    for i, n in enumerate(names):
        params[f"w_{n}"] = jax.random.uniform(
            keys[2 * i], (d_model, d_model), jnp.float32, -bound, bound)
        params[f"b_{n}"] = jax.random.uniform(
            keys[2 * i + 1], (d_model,), jnp.float32, -bound, bound)
    return params


# ----------------------------------------------------------------------------
# Pure-JAX reference (f32 everywhere) for verification
# ----------------------------------------------------------------------------
def reference_mha(query, key, value, raw_params, num_heads):
    B, Sq, D = query.shape
    Sk = key.shape[1]
    d_k = D // num_heads

    def lin(x, w, b):
        return x @ w.T + b

    Q = lin(query, raw_params["w_q"], raw_params["b_q"]).reshape(
        B, Sq, num_heads, d_k).transpose(0, 2, 1, 3)
    K = lin(key, raw_params["w_k"], raw_params["b_k"]).reshape(
        B, Sk, num_heads, d_k).transpose(0, 2, 1, 3)
    V = lin(value, raw_params["w_v"], raw_params["b_v"]).reshape(
        B, Sk, num_heads, d_k).transpose(0, 2, 1, 3)
    scores = jnp.einsum("bhqd,bhkd->bhqk", Q, K) / math.sqrt(d_k)
    attn = jax.nn.softmax(scores, axis=-1)
    ctx = jnp.einsum("bhqk,bhkd->bhqd", attn, V)
    ctx = ctx.transpose(0, 2, 1, 3).reshape(B, Sq, D)
    out = lin(ctx, raw_params["w_o"], raw_params["b_o"])
    return out, attn


if __name__ == "__main__":
    root = jax.random.PRNGKey(0)
    kx, kq, kk, kv, kp, kp2, kx2 = jax.random.split(root, 7)

    # ---- Case 1: small d_k (fallback head-split path), self-attention ----
    B, S, d_model, num_heads = 2, 8, 32, 4
    raw = init_params(kp, d_model)
    params = prepare_params(raw, num_heads)

    x = jax.random.normal(kx, (B, S, d_model), jnp.float32)
    out, attn = multi_head_attention(x, x, x, params, num_heads)
    out = jax.block_until_ready(out)
    attn = jax.block_until_ready(attn)
    out_ref, attn_ref = reference_mha(x, x, x, raw, num_heads)
    assert out.shape == (B, S, d_model)
    assert attn.shape == (B, num_heads, S, S)
    assert jnp.allclose(out, out_ref, atol=5e-2, rtol=5e-2)
    assert jnp.allclose(attn, attn_ref, atol=3e-2)

    # ---- Case 2: small d_k, cross-attention (Skv != Sq) ----
    Skv = 16
    q_in = jax.random.normal(kq, (B, S, d_model), jnp.float32)
    k_in = jax.random.normal(kk, (B, Skv, d_model), jnp.float32)
    v_in = jax.random.normal(kv, (B, Skv, d_model), jnp.float32)
    out2, attn2 = multi_head_attention(q_in, k_in, v_in, params, num_heads)
    out2 = jax.block_until_ready(out2)
    attn2 = jax.block_until_ready(attn2)
    out2_ref, attn2_ref = reference_mha(q_in, k_in, v_in, raw, num_heads)
    assert out2.shape == (B, S, d_model)
    assert attn2.shape == (B, num_heads, S, Skv)
    assert jnp.allclose(out2, out2_ref, atol=5e-2, rtol=5e-2)
    assert jnp.allclose(attn2, attn2_ref, atol=3e-2)

    # ---- Case 3: d_k = 128 (head-folded index_map path, multi kv-step) ----
    B3, S3, d_model3, num_heads3 = 1, 1024, 256, 2
    raw3 = init_params(kp2, d_model3)
    params3 = prepare_params(raw3, num_heads3)
    x3 = jax.random.normal(kx2, (B3, S3, d_model3), jnp.float32)
    out3, attn3 = multi_head_attention(x3, x3, x3, params3, num_heads3)
    out3 = jax.block_until_ready(out3)
    attn3 = jax.block_until_ready(attn3)
    out3_ref, attn3_ref = reference_mha(x3, x3, x3, raw3, num_heads3)
    assert out3.shape == (B3, S3, d_model3)
    assert attn3.shape == (B3, num_heads3, S3, S3)
    assert jnp.allclose(out3, out3_ref, atol=5e-2, rtol=5e-2)
    assert jnp.allclose(attn3, attn3_ref, atol=3e-2)

    # ---- Case 4: folded cross-attention, weights skipped (flash-only path) ----
    Sq4, Skv4 = 256, 1024
    kq4, kk4, kv4 = jax.random.split(jax.random.PRNGKey(1), 3)
    q4 = jax.random.normal(kq4, (B3, Sq4, d_model3), jnp.float32)
    k4 = jax.random.normal(kk4, (B3, Skv4, d_model3), jnp.float32)
    v4 = jax.random.normal(kv4, (B3, Skv4, d_model3), jnp.float32)
    out4, attn4 = multi_head_attention(q4, k4, v4, params3, num_heads3,
                                       return_attention_weights=False)
    out4 = jax.block_until_ready(out4)
    out4_ref, _ = reference_mha(q4, k4, v4, raw3, num_heads3)
    assert attn4 is None
    assert out4.shape == (B3, Sq4, d_model3)
    assert jnp.allclose(out4, out4_ref, atol=5e-2, rtol=5e-2)

    print("KERNEL_OK")
</pallas_src>

<mosaic_0001>
module attributes {stable_mosaic.version = 11 : i64} {
  func.func @_linear_kernel(%arg0: i32, %arg1: i32, %arg2: i32, %arg3: memref<16x32xf32, #tpu.memory_space<vmem>>, %arg4: memref<96x32xbf16, #tpu.memory_space<vmem>>, %arg5: memref<1x96xf32, #tpu.memory_space<vmem>>, %arg6: memref<16x96xbf16, #tpu.memory_space<vmem>>, %arg7: memref<16x96xf32, #tpu.memory_space<vmem>>) attributes {dimension_semantics = [#tpu.dimension_semantics<parallel>, #tpu.dimension_semantics<parallel>, #tpu.dimension_semantics<arbitrary>], iteration_bounds = array<i64: 1, 1, 1>, scalar_prefetch = 0 : i64, scratch_operands = 1 : i64, tpu.core_type = #tpu.core_type<tc>, window_params = [{transform_indices = @transform_0, window_bounds = array<i64: 16, 32>}, {transform_indices = @transform_1, window_bounds = array<i64: 96, 32>}, {transform_indices = @transform_2, window_bounds = array<i64: 1, 96>}, {transform_indices = @transform_3, window_bounds = array<i64: 16, 96>}]} {
    %c0_i32 = arith.constant 0 : i32
    %0 = arith.cmpi eq, %arg2, %c0_i32 : i32
    %1 = arith.extui %0 : i1 to i32
    %c0_i32_0 = arith.constant 0 : i32
    %2 = arith.cmpi ne, %1, %c0_i32_0 : i32
    scf.if %2 {
      %cst_10 = arith.constant 0.000000e+00 : f32
      %13 = vector.broadcast %cst_10 : f32 to vector<16x96xf32>
      %c0_11 = arith.constant 0 : index
      %c0_12 = arith.constant 0 : index
      %14 = vector.load %arg7[%c0_11, %c0_12] : memref<16x96xf32, #tpu.memory_space<vmem>>, vector<16x96xf32>
      tpu.vector_store %arg7[%c0_11, %c0_12], %13 {strides = array<i32>} : memref<16x96xf32, #tpu.memory_space<vmem>>, vector<16x96xf32>,
    } else {
    }
    %c0 = arith.constant 0 : index
    %c0_1 = arith.constant 0 : index
    %3 = vector.load %arg7[%c0, %c0_1] : memref<16x96xf32, #tpu.memory_space<vmem>>, vector<16x96xf32>
    %c0_2 = arith.constant 0 : index
    %c0_3 = arith.constant 0 : index
    %4 = vector.load %arg3[%c0_2, %c0_3] : memref<16x32xf32, #tpu.memory_space<vmem>>, vector<16x32xf32>
    %5 = arith.truncf %4 : vector<16x32xf32> to vector<16x32xbf16>
    %c0_4 = arith.constant 0 : index
    %c0_5 = arith.constant 0 : index
    %6 = vector.load %arg4[%c0_4, %c0_5] : memref<96x32xbf16, #tpu.memory_space<vmem>>, vector<96x32xbf16>
    %cst = arith.constant dense<0.000000e+00> : vector<16x96xf32>
    %7 = tpu.matmul %5, %6, %cst {dimension_numbers = #tpu.dot_dimension_numbers<[1], [1], [0], [0], [0, 0, 1, 0], [], []>} : vector<16x32xbf16>, vector<96x32xbf16>, vector<16x96xf32> -> vector<16x96xf32>
    %8 = arith.addf %3, %7 : vector<16x96xf32>
    %c0_6 = arith.constant 0 : index
    %c0_7 = arith.constant 0 : index
    %9 = vector.load %arg7[%c0_6, %c0_7] : memref<16x96xf32, #tpu.memory_space<vmem>>, vector<16x96xf32>
    tpu.vector_store %arg7[%c0_6, %c0_7], %8 {strides = array<i32>} : memref<16x96xf32, #tpu.memory_space<vmem>>, vector<16x96xf32>,
    %c0_i32_8 = arith.constant 0 : i32
    %10 = arith.cmpi eq, %arg2, %c0_i32_8 : i32
    %11 = arith.extui %10 : i1 to i32
    %c0_i32_9 = arith.constant 0 : i32
    %12 = arith.cmpi ne, %11, %c0_i32_9 : i32
    scf.if %12 {
      %c0_10 = arith.constant 0 : index
      %c0_11 = arith.constant 0 : index
      %13 = vector.load %arg7[%c0_10, %c0_11] : memref<16x96xf32, #tpu.memory_space<vmem>>, vector<16x96xf32>
      %c0_12 = arith.constant 0 : index
      %c0_13 = arith.constant 0 : index
      %14 = vector.load %arg5[%c0_12, %c0_13] : memref<1x96xf32, #tpu.memory_space<vmem>>, vector<1x96xf32>
      %15 = vector.broadcast %14 : vector<1x96xf32> to vector<16x96xf32>
      %16 = arith.addf %13, %15 : vector<16x96xf32>
      %17 = arith.truncf %16 : vector<16x96xf32> to vector<16x96xbf16>
      %c0_14 = arith.constant 0 : index
      %c0_15 = arith.constant 0 : index
      %18 = vector.load %arg6[%c0_14, %c0_15] : memref<16x96xbf16, #tpu.memory_space<vmem>>, vector<16x96xbf16>
      tpu.vector_store %arg6[%c0_14, %c0_15], %17 {strides = array<i32>} : memref<16x96xbf16, #tpu.memory_space<vmem>>, vector<16x96xbf16>,
    } else {
    }
    return
  }
  func.func @transform_0(%arg0: i32, %arg1: i32, %arg2: i32) -> (i32, i32) {
    %c0_i32 = arith.constant 0 : i32
    return %arg0, %arg2 : i32, i32
  }
  func.func @transform_1(%arg0: i32, %arg1: i32, %arg2: i32) -> (i32, i32) {
    %c0_i32 = arith.constant 0 : i32
    return %arg1, %arg2 : i32, i32
  }
  func.func @transform_2(%arg0: i32, %arg1: i32, %arg2: i32) -> (i32, i32) {
    %c0_i32 = arith.constant 0 : i32
    %c0_i32_0 = arith.constant 0 : i32
    return %c0_i32, %arg1 : i32, i32
  }
  func.func @transform_3(%arg0: i32, %arg1: i32, %arg2: i32) -> (i32, i32) {
    %c0_i32 = arith.constant 0 : i32
    return %arg0, %arg1 : i32, i32
  }
}

</mosaic_0001>

<llo_original>
// kernel: tpu_custom_call.1
$region0: #{tpu_custom_call.1}
  #allocation0 [shape = 'u32[]', space=smem, size = 0x4, offset = 0x4, fixed_abs, tag = 'smem constant byte address 0x4 - core index']
  #allocation1 [shape = 'u32[144,128]{1,0:T(1,128)}', space=vmem, size = 0x12000, scoped, tag = 'internal scratch']
  #allocation2 [shape = 'f32[16,96]{1,0:T(8,128)}', space=vmem, size = 0x2000, scoped, tag = 'scratch operand']
  %s0 = inlined_call_operand.vmem [shape: f32[16,32], index: 0, kind: input, shape index: {}]
  %s1 = inlined_call_operand.vmem [shape: bf16[96,32], index: 1, kind: input, shape index: {}]
  %s2 = inlined_call_operand.vmem [shape: f32[1,96], index: 2, kind: input, shape index: {}]
  %s3 = inlined_call_operand.hbm [shape: bf16[16,96], index: 3, kind: output, shape index: {}]
  %s4 = sld [smem:[#allocation0]]
  $region30: #{tpu_custom_call.1} parent=0
    _
  %s6 = ssub.s32 1, %s4
  %s7 = scalar_select 0, %s6, %s4
  $region1: #{tpu_custom_call.1} parent=0
    #allocation3 [shape = 'u8[4096]{0}', space=vmem, size = 0x1000, scoped, tag = 'output window, operand 0, single buffered']
    #allocation4 [shape = 's32[1]{0}', space=sflag, size = 0x4, scoped, tag = 'scoped memory for tpu_custom_call.1']
    %8 = vsyncpa [#allocation4], 0
    // Predicated region
    $region2: #{tpu_custom_call.1} parent=1 // pred_check
      _
    $region3: #{tpu_custom_call.1} parent=1 // pred_check_branch
      %10 = sbr.rel (0) target = $region5
    $region4: #{tpu_custom_call.1} parent=1 // pred_region
      _
    $region5: #{tpu_custom_call.1} parent=1 // pred_fallthru
      _
    // Predicated region
    $region6: #{tpu_custom_call.1} parent=1 // pred_check
      _
    $region7: #{tpu_custom_call.1} parent=1 // pred_check_branch
      %12 = sbr.rel (0) target = $region9
    $region8: #{tpu_custom_call.1} parent=1 // pred_region
      _
    $region9: #{tpu_custom_call.1} parent=1 // pred_fallthru
      _
    // Predicated region
    $region10: #{tpu_custom_call.1} parent=1 // pred_check
      _
    $region11: #{tpu_custom_call.1} parent=1 // pred_check_branch
      %14 = sbr.rel (0) target = $region13
    $region12: #{tpu_custom_call.1} parent=1 // pred_region
      _
    $region13: #{tpu_custom_call.1} parent=1 // pred_fallthru
      _
    %p16 = scmp.eq.s32.totalorder 0, 0
    // Predicated region
    $region14: #{tpu_custom_call.1} parent=1 // pred_check
      %p17 = pneg %p16
    $region15: #{tpu_custom_call.1} parent=1 // pred_check_branch
      %19 = sbr.rel (%p17) target = $region17
    $region16: #{tpu_custom_call.1} parent=1 // pred_region
      %vm20 = vcmask 785408
      %21 = vst.msk [vmem:[#allocation2] sm:$0xff] %vm20, 0.0
      %22 = vst.msk [vmem:[#allocation2 + $0x8] sm:$0xff] %vm20, 0.0
    $region17: #{tpu_custom_call.1} parent=1 // pred_fallthru
      _
    %v23 = vld [vmem:[#allocation2] sm:$0xff]
    %v24 = vld [vmem:[#allocation2 + $0x8] sm:$0xff]
    %v25 = vld [vmem:[%s0] sm:$0xff]
    %v26 = vld [vmem:[%s0 + $0x8] sm:$0xff]
    %v27 = vpack.c.bf16 %v26, %v25
    %v28 = vld [vmem:[%s1] sm:$0xf]
    %v29 = vld [vmem:[%s1 + $0x4] sm:$0xf]
    %v30 = vld [vmem:[%s1 + $0x8] sm:$0xf]
    %v31 = vld [vmem:[%s1 + $0xc] sm:$0xf]
    %v32 = vld [vmem:[%s1 + $0x10] sm:$0xf]
    %v33 = vld [vmem:[%s1 + $0x14] sm:$0xf]
    %v34 = vld [vmem:[%s1 + $0x18] sm:$0xf]
    %v35 = vld [vmem:[%s1 + $0x1c] sm:$0xf]
    %v36 = vld [vmem:[%s1 + $0x20] sm:$0xf]
    %v37 = vld [vmem:[%s1 + $0x24] sm:$0xf]
    %v38 = vld [vmem:[%s1 + $0x28] sm:$0xf]
    %v39 = vld [vmem:[%s1 + $0x2c] sm:$0xf]
    %v52 = vunpack.c.l.b16 %v28
    %v53 = vunpack.c.l.b16 %v29
    %v54 = vunpack.c.l.b16 %v30
    %v55 = vunpack.c.l.b16 %v31
    %v56 = vunpack.c.l.b16 %v32
    %v57 = vunpack.c.l.b16 %v33
    %v58 = vunpack.c.l.b16 %v34
    %v59 = vunpack.c.l.b16 %v35
    %v60 = vunpack.c.l.b16 %v36
    %v61 = vunpack.c.l.b16 %v37
    %v62 = vunpack.c.l.b16 %v38
    %v63 = vunpack.c.l.b16 %v39
    %v64 = vpack.c.b16 %v53, %v52
    %v65 = vpack.c.b16 %v55, %v54
    %v66 = vpack.c.b16 %v57, %v56
    %v67 = vpack.c.b16 %v59, %v58
    %v68 = vpack.c.b16 %v61, %v60
    %v69 = vpack.c.b16 %v63, %v62
    %vm70 = vcmask 261120
    %v72 = vsel %vm70, %v27, 0
    %v75 = vsel %vm70, %v64, 0
    %v78 = vsel %vm70, %v65, 0
    %v81 = vsel %vm70, %v66, 0
    %v84 = vsel %vm70, %v67, 0
    %v87 = vsel %vm70, %v68, 0
    %v90 = vsel %vm70, %v69, 0
    %92 = vmatprep.subr.bf16.mxu0 0
    %93 = vmatpush1.bf16.xpose.msra.mxu0 0
    %94 = vmatprep.subr.bf16.mxu0 0
    %95 = vmatpush1.bf16.xpose.msra.mxu0 0
    %96 = vmatprep.subr.bf16.mxu0 0
    %97 = vmatpush1.bf16.xpose.msra.mxu0 %v90
    %98 = vmatprep.subr.bf16.mxu0 0
    %99 = vmatpush1.bf16.xpose.msra.mxu0 %v87
    %100 = vmatprep.subr.bf16.mxu0 0
    %101 = vmatpush1.bf16.xpose.msra.mxu0 %v84
    %102 = vmatprep.subr.bf16.mxu0 0
    %103 = vmatpush1.bf16.xpose.msra.mxu0 %v81
    %104 = vmatprep.subr.bf16.mxu0 0
    %105 = vmatpush1.bf16.xpose.msra.mxu0 %v78
    %106 = vmatprep.subr.bf16.mxu0 0
    %107 = vmatpush1.bf16.xpose.msra.mxu0 %v75
    %108 = vmatprep.subr.bf16.mxu0 0
    %109 = vmatpush2.bf16.xpose.msra.mxu0 0
    %110 = vmatprep.subr.bf16.mxu0 0
    %111 = vmatpush2.bf16.xpose.msra.mxu0 0
    %112 = vmatprep.subr.bf16.mxu0 0
    %113 = vmatpush2.bf16.xpose.msra.mxu0 0
    %114 = vmatprep.subr.bf16.mxu0 0
    %115 = vmatpush2.bf16.xpose.msra.mxu0 0
    %116 = vmatprep.subr.bf16.mxu0 0
    %117 = vmatpush2.bf16.xpose.msra.mxu0 0
    %118 = vmatprep.subr.bf16.mxu0 0
    %119 = vmatpush2.bf16.xpose.msra.mxu0 0
    %120 = vmatprep.subr.bf16.mxu0 0
    %121 = vmatpush2.bf16.xpose.msra.mxu0 0
    %122 = vmatprep.subr.bf16.mxu0 0
    %123 = vmatpush2.bf16.xpose.msra.mxu0 0
    %124 = vmatprep.mubr.bf16.mxu0 0
    %125 = vmatmul.mubr.bf16.gmra.mxu0 %v72
    %v126 = vpop.f32.mrf.mxu0
    %v127 = vadd.f32 0.0, %v126
    %v128 = vpop.f32.mrf.mxu0
    %v129 = vpop.f32.mrf.mxu0
    %v130 = vadd.f32 0.0, %v129
    %v131 = vpop.f32.mrf.mxu0
    %132 = vdwg.mxu0
    %v133 = vadd.f32 %v23, %v127
    %v134 = vadd.f32 %v24, %v130
    %vm135 = vcmask 785408
    %136 = vst.msk [vmem:[#allocation2] sm:$0xff] %vm135, %v133
    %137 = vst.msk [vmem:[#allocation2 + $0x8] sm:$0xff] %vm135, %v134
    // Predicated region
    $region18: #{tpu_custom_call.1} parent=1 // pred_check
      %p138 = pneg %p16
    $region19: #{tpu_custom_call.1} parent=1 // pred_check_branch
      %140 = sbr.rel (%p138) target = $region21
    $region20: #{tpu_custom_call.1} parent=1 // pred_region
      %v141 = vld [vmem:[#allocation2] sm:$0xff]
      %v142 = vld [vmem:[#allocation2 + $0x8] sm:$0xff]
      %v143 = vld [vmem:[%s2] sm:$0x1]
      %v145 = vlaneseq
      %v146 = vshrl.u32 %v145, 7
      %v147 = vsub.s32 0, %v146
      %v148 = vrot.slane %v143, %v147
      %v150 = vadd.f32 %v141, %v148
      %v151 = vadd.f32 %v142, %v148
      %v152 = vpack.c.bf16 %v151, %v150
      %v154 = vunpack.c.l.b16 %v152
      %v155 = vunpack.c.h.b16 %v152
      %v156 = vpack.c.b16 %v154, %v154
      %v157 = vpack.c.b16 %v155, %v155
      %vm160 = vcmask 781312
      %161 = vst.msk [vmem:[#allocation3] sm:$0xf] %vm160, %v156
      %162 = vst.msk [vmem:[#allocation3 + $0x4] sm:$0xf] %vm160, %v157
    $region21: #{tpu_custom_call.1} parent=1 // pred_fallthru
      _
    // Predicated region
    $region22: #{tpu_custom_call.1} parent=1 // pred_check
      _
    $region23: #{tpu_custom_call.1} parent=1 // pred_check_branch
      %164 = sbr.rel (0) target = $region25
    $region24: #{tpu_custom_call.1} parent=1 // pred_region
      %s166 = ssub.s32 128, 128
      %167 = vsyncadd [#allocation4], %s166
      %s168 = sshll.u32 [#allocation3], 4
      %s169 = int_to_ptr.vmem [resolvable:$true] %s168
      %174 = dma.vmem_to_hbm [thread:$0]  %s169, 128, %s3, [#allocation4], 64, 64, 4
    $region25: #{tpu_custom_call.1} parent=1 // pred_fallthru
      _
    // Predicated region
    $region26: #{tpu_custom_call.1} parent=1 // pred_check
      _
    $region27: #{tpu_custom_call.1} parent=1 // pred_check_branch
      %176 = sbr.rel (0) target = $region29
    $region28: #{tpu_custom_call.1} parent=1 // pred_region
      %177 = dma.done [#allocation4], 128
    $region29: #{tpu_custom_call.1} parent=1 // pred_fallthru
      _
    %178 = vsyncpa [#allocation4], 1

</llo_original>
